<compile_context>
chip_gen: v6e
topology: v6e:2x2x1
jax: 0.10.0
libtpu: 0.0.40
codegen_flags: <defaults>
</compile_context>

<pallas_src>
import jax
import jax.numpy as jnp
from jax.experimental import pallas as pl
from jax.experimental.pallas import tpu as pltpu


_LANE = 128
_WIDTH = 8 * _LANE              # 1024-wide, lane-dense last dim -> unmasked vst
_ROW_MULT = 32                  # multiple of 8/16/32 sublanes (f32/bf16/int8 safe)
_TARGET_BLOCK_BYTES = 4 << 20   # ~4 MiB block; 2 bufs x (in+out) ~= 16 MiB VMEM
_VMEM_LIMIT_BYTES = 32 << 20    # raise v5e's 16 MiB scoped default; <= v7x physical


def _copy_kernel(x_ref, o_ref):
    # Identity copy of the current tile.
    o_ref[...] = x_ref[...]


def _copy_call(slab, tile_rows):
    """Pipelined identity copy of a (rows, width) slab, tiled along rows."""
    rows, width = slab.shape
    nbytes = slab.size * slab.dtype.itemsize
    return pl.pallas_call(
        _copy_kernel,
        out_shape=jax.ShapeDtypeStruct((rows, width), slab.dtype),
        grid=(rows // tile_rows,),
        in_specs=[pl.BlockSpec((tile_rows, width), lambda i: (i, 0))],
        out_specs=pl.BlockSpec((tile_rows, width), lambda i: (i, 0)),
        # In-place when donatable; XLA inserts a copy otherwise (still correct).
        input_output_aliases={0: 0},
        compiler_params=pltpu.CompilerParams(
            # Parallel grid axis: lets v7x shard the copy across its 2 TCs.
            dimension_semantics=("parallel",),
            vmem_limit_bytes=_VMEM_LIMIT_BYTES,
        ),
        cost_estimate=pl.CostEstimate(
            flops=0, transcendentals=0, bytes_accessed=2 * nbytes
        ),
    )(slab)


def _pallas_identity_copy(flat):
    """HBM->HBM identity copy of a flat 1-D buffer via tiled Pallas kernels."""
    total = int(flat.shape[0])
    if total == 0:
        return flat
    itemsize = flat.dtype.itemsize

    # Rows per block: ~4 MiB blocks, rows a multiple of 32 (dtype-agnostic
    # sublane packing: 8 sublanes f32, 16 bf16, 32 int8/fp8).
    tile_rows = max(
        _ROW_MULT,
        (_TARGET_BLOCK_BYTES // (_WIDTH * itemsize)) // _ROW_MULT * _ROW_MULT,
    )
    chunk_elems = tile_rows * _WIDTH

    main_elems = (total // chunk_elems) * chunk_elems
    pieces = []

    if main_elems:
        main = jnp.reshape(flat[:main_elems], (main_elems // _WIDTH, _WIDTH))
        pieces.append(jnp.reshape(_copy_call(main, tile_rows), (-1,)))

    rem = total - main_elems
    if rem:
        rem_flat = flat[main_elems:]
        if rem % _LANE == 0:
            rem_slab = jnp.reshape(rem_flat, (rem // _LANE, _LANE))
        else:
            # Block == full array dims is always legal; rem < one block (<~4 MiB),
            # so a single full-extent block is VMEM-safe on every generation.
            rem_slab = jnp.reshape(rem_flat, (1, rem))
        pieces.append(jnp.reshape(_copy_call(rem_slab, rem_slab.shape[0]), (-1,)))

    if len(pieces) == 1:
        return pieces[0]
    return jnp.concatenate(pieces)


def _resolve_shape(target_shape, total):
    """Resolve a single -1 dimension, PyTorch .view() style."""
    if isinstance(target_shape, int):
        target_shape = (target_shape,)
    target_shape = tuple(int(d) for d in target_shape)
    if -1 in target_shape:
        known = 1
        for d in target_shape:
            if d != -1:
                known *= d
        assert known != 0 and total % known == 0, "invalid shape for view"
        target_shape = tuple(total // known if d == -1 else d for d in target_shape)
    prod = 1
    for d in target_shape:
        prod *= d
    assert prod == total, "shape is invalid for input of this size"
    return target_shape


class Reshape:
    """JAX/Pallas equivalent of the PyTorch Reshape(nn.Module).

    use_pallas_copy=False (recommended for production) returns a metadata-only
    jnp.reshape — zero HBM traffic. use_pallas_copy=True routes the data through
    the tiled Pallas identity-copy kernel (used here so the kernel is exercised).
    """

    def __init__(self, *args, use_pallas_copy=True):
        # mirror the PyTorch module: self.shape = args; forward uses shape[0]
        self.shape = args
        self.use_pallas_copy = use_pallas_copy

    def __call__(self, x):
        target_shape = _resolve_shape(self.shape[0], x.size)

        if not self.use_pallas_copy:
            # Zero-cost path: reshape of a contiguous array is metadata-only.
            return jnp.reshape(x, target_shape)

        flat = jnp.reshape(x, (x.size,))
        out_flat = _pallas_identity_copy(flat)
        return jnp.reshape(out_flat, target_shape)


if __name__ == "__main__":
    key = jax.random.PRNGKey(0)
    # Small shapes consistent with a GAN discriminator flatten:
    # x: (batch=2, channels=4, H=16, W=16) -> Reshape((-1, 4*16*16))
    x = jax.random.normal(key, (2, 4, 16, 16), dtype=jnp.float32)

    # Pallas-copy path (exercises the kernel).
    module = Reshape((-1, 4 * 16 * 16))
    y = module(x)
    y = jax.block_until_ready(y)

    expected = jnp.reshape(x, (2, 4 * 16 * 16))
    assert y.shape == (2, 1024), y.shape
    assert y.dtype == x.dtype
    assert bool(jnp.array_equal(y, expected))

    # Metadata-only path (the recommended zero-cost default in real use).
    y_fast = Reshape((-1, 4 * 16 * 16), use_pallas_copy=False)(x)
    y_fast = jax.block_until_ready(y_fast)
    assert bool(jnp.array_equal(y_fast, expected))

    print("KERNEL_OK")
</pallas_src>

<mosaic_0001>
module attributes {stable_mosaic.version = 11 : i64} {
  func.func @_copy_kernel(%arg0: i32, %arg1: memref<16x128xf32, #tpu.memory_space<vmem>>, %arg2: memref<16x128xf32, #tpu.memory_space<vmem>>) attributes {dimension_semantics = [#tpu.dimension_semantics<parallel>], iteration_bounds = array<i64: 1>, scalar_prefetch = 0 : i64, scratch_operands = 0 : i64, tpu.core_type = #tpu.core_type<tc>, window_params = [{transform_indices = @transform_0, window_bounds = array<i64: 16, 128>}, {transform_indices = @transform_1, window_bounds = array<i64: 16, 128>}]} {
    %c0 = arith.constant 0 : index
    %c0_0 = arith.constant 0 : index
    %0 = vector.load %arg1[%c0, %c0_0] : memref<16x128xf32, #tpu.memory_space<vmem>>, vector<16x128xf32>
    %c0_1 = arith.constant 0 : index
    %c0_2 = arith.constant 0 : index
    %1 = vector.load %arg2[%c0_1, %c0_2] : memref<16x128xf32, #tpu.memory_space<vmem>>, vector<16x128xf32>
    tpu.vector_store %arg2[%c0_1, %c0_2], %0 {strides = array<i32>} : memref<16x128xf32, #tpu.memory_space<vmem>>, vector<16x128xf32>,
    return
  }
  func.func @transform_0(%arg0: i32) -> (i32, i32) {
    %c0_i32 = arith.constant 0 : i32
    %c0_i32_0 = arith.constant 0 : i32
    return %arg0, %c0_i32 : i32, i32
  }
  func.func @transform_1(%arg0: i32) -> (i32, i32) {
    %c0_i32 = arith.constant 0 : i32
    %c0_i32_0 = arith.constant 0 : i32
    return %arg0, %c0_i32 : i32, i32
  }
}

</mosaic_0001>

<llo_original>
// kernel: tpu_custom_call.1
$region0: #{tpu_custom_call.1}
  #allocation0 [shape = 'u32[]', space=smem, size = 0x4, offset = 0x4, fixed_abs, tag = 'smem constant byte address 0x4 - core index']
  #allocation1 [shape = 'u32[144,128]{1,0:T(1,128)}', space=vmem, size = 0x12000, scoped, tag = 'internal scratch']
  %s0 = inlined_call_operand.hbm [shape: f32[16,128], index: 0, kind: input, shape index: {}, may-alias: {0,1}]
  %s1 = inlined_call_operand.hbm [shape: f32[16,128], index: 1, kind: output, shape index: {}, may-alias: {0,1}]
  %s2 = sld [smem:[#allocation0]]
  $region18: #{tpu_custom_call.1} parent=0
    _
  %s4 = ssub.s32 1, %s2
  %s5 = scalar_select 0, %s4, %s2
  $region1: #{tpu_custom_call.1} parent=0
    #allocation2 [shape = 'u8[8192]{0}', space=vmem, size = 0x2000, scoped, tag = 'input window, operand 0, single buffered']
    #allocation3 [shape = 's32[1]{0}', space=sflag, size = 0x4, scoped, tag = 'scoped memory for tpu_custom_call.1']
    #allocation4 [shape = 's32[1]{0}', space=sflag, size = 0x4, scoped, tag = 'scoped memory for tpu_custom_call.1']
    #allocation5 [shape = 'u8[8192]{0}', space=vmem, size = 0x2000, scoped, tag = 'output window, operand 0, single buffered']
    %6 = vsyncpa [#allocation3], 0
    %7 = vsyncpa [#allocation4], 0
    // Predicated region
    $region2: #{tpu_custom_call.1} parent=1 // pred_check
      _
    $region3: #{tpu_custom_call.1} parent=1 // pred_check_branch
      %9 = sbr.rel (0) target = $region5
    $region4: #{tpu_custom_call.1} parent=1 // pred_region
      %s11 = ssub.s32 256, 256
      %12 = vsyncadd [#allocation3], %s11
      %s13 = sshll.u32 [#allocation2], 4
      %s14 = int_to_ptr.vmem [resolvable:$true] %s13
      %19 = dma.hbm_to_vmem [thread:$0]  %s0, 256, %s14, [#allocation3], 128, 128, 8
    $region5: #{tpu_custom_call.1} parent=1 // pred_fallthru
      _
    // Predicated region
    $region6: #{tpu_custom_call.1} parent=1 // pred_check
      _
    $region7: #{tpu_custom_call.1} parent=1 // pred_check_branch
      %21 = sbr.rel (0) target = $region9
    $region8: #{tpu_custom_call.1} parent=1 // pred_region
      %22 = dma.done [#allocation3], 256
    $region9: #{tpu_custom_call.1} parent=1 // pred_fallthru
      _
    %v23 = vld [vmem:[#allocation2] sm:$0xff]
    %v24 = vld [vmem:[#allocation2 + $0x8] sm:$0xff]
    %25 = vst [vmem:[#allocation5] sm:$0xff] %v23
    %26 = vst [vmem:[#allocation5 + $0x8] sm:$0xff] %v24
    // Predicated region
    $region10: #{tpu_custom_call.1} parent=1 // pred_check
      _
    $region11: #{tpu_custom_call.1} parent=1 // pred_check_branch
      %28 = sbr.rel (0) target = $region13
    $region12: #{tpu_custom_call.1} parent=1 // pred_region
      %s30 = ssub.s32 256, 256
      %31 = vsyncadd [#allocation4], %s30
      %s32 = sshll.u32 [#allocation5], 4
      %s33 = int_to_ptr.vmem [resolvable:$true] %s32
      %38 = dma.vmem_to_hbm [thread:$0]  %s33, 256, %s1, [#allocation4], 128, 128, 8
    $region13: #{tpu_custom_call.1} parent=1 // pred_fallthru
      _
    // Predicated region
    $region14: #{tpu_custom_call.1} parent=1 // pred_check
      _
    $region15: #{tpu_custom_call.1} parent=1 // pred_check_branch
      %40 = sbr.rel (0) target = $region17
    $region16: #{tpu_custom_call.1} parent=1 // pred_region
      %41 = dma.done [#allocation4], 256
    $region17: #{tpu_custom_call.1} parent=1 // pred_fallthru
      _
    %42 = vsyncpa [#allocation3], 1
    %43 = vsyncpa [#allocation4], 1

</llo_original>
